<compile_context>
chip_gen: v5e
topology: v5e:2x2
jax: 0.10.0
libtpu: 0.0.40
codegen_flags: <defaults>
</compile_context>

<pallas_src>
import jax
import jax.numpy as jnp
from jax import lax
from jax.experimental import pallas as pl
from jax.experimental.pallas import tpu as pltpu


def _round_up(v, m):
    return (v + m - 1) // m * m


def _linear_kernel(x_ref, w_ref, o_ref):
    # x_ref: (tm, K), w_ref: (K, Np) resident in VMEM  ->  o = x @ w : (tm, Np)
    o_ref[...] = jnp.dot(
        x_ref[...], w_ref[...], preferred_element_type=jnp.float32
    ).astype(o_ref.dtype)


def _linear_kernel_kgrid(x_ref, w_ref, o_ref, acc_ref):
    # x_ref: (tm, tk), w_ref: (tk, tn)  ->  f32 accumulation over the K grid axis.
    @pl.when(pl.program_id(2) == 0)
    def _():
        acc_ref[...] = jnp.zeros_like(acc_ref)

    acc_ref[...] += jnp.dot(
        x_ref[...], w_ref[...], preferred_element_type=jnp.float32
    )

    @pl.when(pl.program_id(2) == pl.num_programs(2) - 1)
    def _():
        o_ref[...] = acc_ref[...].astype(o_ref.dtype)


def key_forward(x, weight, *, compute_dtype=jnp.bfloat16, out_dtype=None):
    """Pallas equivalent of Key.forward: y = x @ weight.T (nn.Linear, no bias).

    x:      [..., dim_input]
    weight: [dim_attn, dim_input]  (PyTorch nn.Linear weight layout)
    """
    dim_attn, dim_input = weight.shape
    orig_shape = x.shape
    assert orig_shape[-1] == dim_input
    if out_dtype is None:
        out_dtype = x.dtype

    x2d = x.reshape(-1, dim_input)
    if compute_dtype is not None:
        x2d = x2d.astype(compute_dtype)
        weight = weight.astype(compute_dtype)

    M, K = x2d.shape
    N = dim_attn
    in_item = jnp.dtype(x2d.dtype).itemsize
    out_item = jnp.dtype(out_dtype).itemsize
    sub = 8 if in_item >= 4 else 16  # sublane multiple for the compute dtype

    # ---- per-generation VMEM budget (v7x has only 64 MiB physical) ----
    try:
        vmem_cap = int(pltpu.get_tpu_info().vmem_capacity_bytes)
    except Exception:
        vmem_cap = 64 * 2**20  # conservative (v7x-sized) default
    vmem_budget = min(vmem_cap // 2, 64 * 2**20)      # our tile working-set target
    vmem_limit = min(vmem_cap * 3 // 4, 96 * 2**20)   # scoped limit handed to Mosaic

    # Pre-transpose the weight once (small, amortized over all M tiles / calls) so the
    # kernel contracts on the natural (K, N) layout -> no per-tile XLU transpose.
    wT = weight.T  # (K, N)

    # ---- weight-resident fast path: whole (K, Np) weight lives in VMEM ----
    Np = _round_up(N, 128)  # lane-dense output
    resident_w_bytes = 2 * K * Np * in_item  # conservative: assume double-buffered
    resident = resident_w_bytes <= min(16 * 2**20, vmem_budget // 2)

    if resident:
        tm = min(512, _round_up(M, sub))
        # Keep >= 2 M blocks when it pays off, so both v7x TensorCores get work.
        if pl.cdiv(M, tm) < 2 and M >= 256:
            tm = _round_up(pl.cdiv(M, 2), sub)

        def _fits_res(tm_):
            return (2 * tm_ * K * in_item           # x panel (double-buffered)
                    + 2 * tm_ * Np * out_item       # out tile (double-buffered)
                    + resident_w_bytes) <= vmem_budget

        while not _fits_res(tm) and tm > sub:
            tm = max(sub, _round_up(tm // 2, sub))
        if not _fits_res(tm):
            resident = False

    if resident:
        if Np != N:
            wT = jnp.pad(wT, ((0, 0), (0, Np - N)))  # cheap: weight only
        gm = pl.cdiv(M, tm)
        cost = pl.CostEstimate(
            flops=2 * M * K * Np,
            transcendentals=0,
            bytes_accessed=(M * K + K * Np) * in_item + M * Np * out_item,
        )
        out_p = pl.pallas_call(
            _linear_kernel,
            out_shape=jax.ShapeDtypeStruct((M, Np), out_dtype),
            grid=(gm,),
            in_specs=[
                pl.BlockSpec((tm, K), lambda i: (i, 0)),
                pl.BlockSpec((K, Np), lambda i: (0, 0)),  # fetched once, stays resident
            ],
            out_specs=pl.BlockSpec((tm, Np), lambda i: (i, 0)),
            compiler_params=pltpu.CompilerParams(
                dimension_semantics=("parallel",),
                vmem_limit_bytes=vmem_limit,
            ),
            cost_estimate=cost,
        )(x2d, wT)
        return out_p[:, :N].reshape(*orig_shape[:-1], dim_attn)

    # ---- general tiled path: (M, N, K) grid with f32 accumulator scratch ----
    Np = _round_up(N, 256) if N > 128 else 128
    tn = 512 if (Np % 512 == 0 and Np >= 512) else min(Np, 256)
    tk_cap = 2048 if in_item <= 2 else 1024
    tk = K if K <= tk_cap else tk_cap
    tm = min(512, _round_up(M, sub))
    if pl.cdiv(M, tm) < 2 and M >= 256:
        tm = _round_up(pl.cdiv(M, 2), sub)

    def _fits(tm_, tn_, tk_):
        return (2 * (tm_ * tk_ + tk_ * tn_) * in_item
                + 2 * tm_ * tn_ * out_item
                + tm_ * tn_ * 4) <= vmem_budget

    while not _fits(tm, tn, tk) and tk > 512:
        tk = max(512, _round_up(tk // 2, 128))
    while not _fits(tm, tn, tk) and tm > sub:
        tm = max(sub, _round_up(tm // 2, sub))
    while not _fits(tm, tn, tk) and tn > 128:
        tn = max(128, tn // 2)

    Kp = _round_up(K, tk)
    # Zero-pad K when tiled (garbage in the contraction dim would be a correctness bug)
    # and pad the (comparatively small) weight on N. M is never padded (ragged grid).
    if Kp != K:
        x2d = jnp.pad(x2d, ((0, 0), (0, Kp - K)))
    if (Kp, Np) != (K, N):
        wT = jnp.pad(wT, ((0, Kp - K), (0, Np - N)))

    gm, gn, gk = pl.cdiv(M, tm), Np // tn, Kp // tk
    cost = pl.CostEstimate(
        flops=2 * M * Kp * Np,
        transcendentals=0,
        bytes_accessed=(gn * M * Kp + gm * Np * Kp) * in_item + M * Np * out_item,
    )
    out_p = pl.pallas_call(
        _linear_kernel_kgrid,
        out_shape=jax.ShapeDtypeStruct((M, Np), out_dtype),
        grid=(gm, gn, gk),
        in_specs=[
            pl.BlockSpec((tm, tk), lambda i, j, k: (i, k)),
            pl.BlockSpec((tk, tn), lambda i, j, k: (k, j)),
        ],
        out_specs=pl.BlockSpec((tm, tn), lambda i, j, k: (i, j)),
        scratch_shapes=[pltpu.VMEM((tm, tn), jnp.float32)],
        compiler_params=pltpu.CompilerParams(
            dimension_semantics=("parallel", "parallel", "arbitrary"),
            vmem_limit_bytes=vmem_limit,
        ),
        cost_estimate=cost,
    )(x2d, wT)
    return out_p[:, :N].reshape(*orig_shape[:-1], dim_attn)


if __name__ == "__main__":
    # Small shapes consistent with Key(dim_input, dim_attn) applied to [batch, seq, dim_input].
    batch, seq, dim_input, dim_attn = 2, 8, 32, 32

    key = jax.random.PRNGKey(0)
    kx, kw, kx2, kw2, kx3, kw3 = jax.random.split(key, 6)

    x = jax.random.normal(kx, (batch, seq, dim_input), dtype=jnp.float32)
    weight = jax.random.normal(kw, (dim_attn, dim_input), dtype=jnp.float32) * (
        1.0 / jnp.sqrt(dim_input)
    )
    ref = jnp.einsum("bsi,ai->bsa", x, weight, precision=lax.Precision.HIGHEST)

    # Exact-precision path (f32 operands) -- matches nn.Linear numerics tightly.
    out_f32 = jax.block_until_ready(key_forward(x, weight, compute_dtype=None))
    assert out_f32.shape == (batch, seq, dim_attn)
    assert out_f32.dtype == jnp.float32
    assert jnp.allclose(out_f32, ref, atol=1e-4, rtol=1e-4)

    # Default fast path (bf16 operands, f32 accumulation, f32 output).
    out_bf = jax.block_until_ready(key_forward(x, weight))
    assert out_bf.shape == (batch, seq, dim_attn)
    assert out_bf.dtype == jnp.float32
    assert jnp.allclose(out_bf, ref, atol=6e-2, rtol=6e-2)

    # Larger shape, still the weight-resident single-panel path.
    Mb, Kb, Nb = 512, 1536, 384
    xb = jax.random.normal(kx2, (Mb, Kb), dtype=jnp.float32)
    wb = jax.random.normal(kw2, (Nb, Kb), dtype=jnp.float32) * (1.0 / jnp.sqrt(Kb))
    outb = jax.block_until_ready(key_forward(xb, wb))
    refb = jnp.einsum("mk,nk->mn", xb, wb, precision=lax.Precision.HIGHEST)
    assert outb.shape == (Mb, Nb)
    assert jnp.allclose(outb, refb, atol=6e-2, rtol=6e-2)

    # Large weight: exercises the general (M, N, K)-tiled accumulator fallback path.
    Mc, Kc, Nc = 128, 4096, 2048
    xc = jax.random.normal(kx3, (Mc, Kc), dtype=jnp.float32)
    wc = jax.random.normal(kw3, (Nc, Kc), dtype=jnp.float32) * (1.0 / jnp.sqrt(Kc))
    outc = jax.block_until_ready(key_forward(xc, wc))
    refc = jnp.einsum("mk,nk->mn", xc, wc, precision=lax.Precision.HIGHEST)
    assert outc.shape == (Mc, Nc)
    assert jnp.allclose(outc, refc, atol=6e-2, rtol=6e-2)

    print("KERNEL_OK")
</pallas_src>

<mosaic_0001>
module attributes {stable_mosaic.version = 11 : i64} {
  func.func @_linear_kernel(%arg0: i32, %arg1: memref<16x32xf32, #tpu.memory_space<vmem>>, %arg2: memref<32x128xf32, #tpu.memory_space<vmem>>, %arg3: memref<16x128xf32, #tpu.memory_space<vmem>>) attributes {dimension_semantics = [#tpu.dimension_semantics<parallel>], iteration_bounds = array<i64: 1>, scalar_prefetch = 0 : i64, scratch_operands = 0 : i64, tpu.core_type = #tpu.core_type<tc>, window_params = [{transform_indices = @transform_0, window_bounds = array<i64: 16, 32>}, {pipeline_mode = #tpu.pipeline_mode<synchronous>, transform_indices = @transform_1, window_bounds = array<i64: 32, 128>}, {transform_indices = @transform_2, window_bounds = array<i64: 16, 128>}]} {
    %c0 = arith.constant 0 : index
    %c0_0 = arith.constant 0 : index
    %0 = vector.load %arg1[%c0, %c0_0] : memref<16x32xf32, #tpu.memory_space<vmem>>, vector<16x32xf32>
    %c0_1 = arith.constant 0 : index
    %c0_2 = arith.constant 0 : index
    %1 = vector.load %arg2[%c0_1, %c0_2] : memref<32x128xf32, #tpu.memory_space<vmem>>, vector<32x128xf32>
    %cst = arith.constant dense<0.000000e+00> : vector<16x128xf32>
    %2 = tpu.matmul %0, %1, %cst {dimension_numbers = #tpu.dot_dimension_numbers<[1], [0], [0], [1], [0, 0, 1, 1], [], []>} : vector<16x32xf32>, vector<32x128xf32>, vector<16x128xf32> -> vector<16x128xf32>
    %c0_3 = arith.constant 0 : index
    %c0_4 = arith.constant 0 : index
    %3 = vector.load %arg3[%c0_3, %c0_4] : memref<16x128xf32, #tpu.memory_space<vmem>>, vector<16x128xf32>
    tpu.vector_store %arg3[%c0_3, %c0_4], %2 {strides = array<i32>} : memref<16x128xf32, #tpu.memory_space<vmem>>, vector<16x128xf32>,
    return
  }
  func.func @transform_0(%arg0: i32) -> (i32, i32) {
    %c0_i32 = arith.constant 0 : i32
    %c0_i32_0 = arith.constant 0 : i32
    return %arg0, %c0_i32 : i32, i32
  }
  func.func @transform_1(%arg0: i32) -> (i32, i32) {
    %c0_i32 = arith.constant 0 : i32
    %c0_i32_0 = arith.constant 0 : i32
    %c0_i32_1 = arith.constant 0 : i32
    return %c0_i32, %c0_i32_0 : i32, i32
  }
  func.func @transform_2(%arg0: i32) -> (i32, i32) {
    %c0_i32 = arith.constant 0 : i32
    %c0_i32_0 = arith.constant 0 : i32
    return %arg0, %c0_i32 : i32, i32
  }
}

</mosaic_0001>

<llo_original>
// kernel: tpu_custom_call.1
$region0: #{tpu_custom_call.1}
  #allocation0 [shape = 'u32[]', space=smem, size = 0x4, offset = 0x4, fixed_abs, tag = 'smem constant byte address 0x4 - core index']
  #allocation1 [shape = 'u32[72,128]{1,0:T(1,128)}', space=vmem, size = 0x9000, scoped, tag = 'internal scratch']
  %s0 = inlined_call_operand.hbm [shape: f32[16,32], index: 0, kind: input, shape index: {}]
  %s1 = inlined_call_operand.hbm [shape: f32[32,128], index: 1, kind: input, shape index: {}]
  %s2 = inlined_call_operand.hbm [shape: f32[16,128], index: 2, kind: output, shape index: {}]
  %s3 = sld [smem:[#allocation0]]
  $region26: #{tpu_custom_call.1} parent=0
    _
  %s5 = ssub.s32 1, %s3
  %s6 = scalar_select 0, %s5, %s3
  $region1: #{tpu_custom_call.1} parent=0
    #allocation2 [shape = 'u8[8192]{0}', space=vmem, size = 0x2000, scoped, tag = 'input window, operand 0, single buffered']
    #allocation3 [shape = 's32[1]{0}', space=sflag, size = 0x4, scoped, tag = 'scoped memory for tpu_custom_call.1']
    #allocation4 [shape = 's32[1]{0}', space=sflag, size = 0x4, scoped, tag = 'scoped memory for tpu_custom_call.1']
    #allocation5 [shape = 'u8[16384]{0}', space=vmem, size = 0x4000, scoped, tag = 'input window, operand 1, single buffered']
    #allocation6 [shape = 's32[1]{0}', space=sflag, size = 0x4, scoped, tag = 'scoped memory for tpu_custom_call.1']
    #allocation7 [shape = 'u8[8192]{0}', space=vmem, size = 0x2000, scoped, tag = 'output window, operand 0, single buffered']
    %7 = vsyncpa [#allocation3], 0
    %8 = vsyncpa [#allocation6], 0
    %9 = vsyncpa [#allocation4], 0
    // Predicated region
    $region2: #{tpu_custom_call.1} parent=1 // pred_check
      _
    $region3: #{tpu_custom_call.1} parent=1 // pred_check_branch
      %11 = sbr.rel (0) target = $region5
    $region4: #{tpu_custom_call.1} parent=1 // pred_region
      %13 = vsyncadd [#allocation3], 0
      %s14 = sshll.u32 %s0, 4
      %s15 = int_to_ptr.hbm [resolvable:$true] %s14
      %s16 = sshll.u32 [#allocation2], 4
      %s17 = int_to_ptr.vmem [resolvable:$true] %s16
      %22 = dma.hbm_to_vmem [thread:$0]  %s15, 256, %s17, [#allocation3], 128, 128, 8
    $region5: #{tpu_custom_call.1} parent=1 // pred_fallthru
      _
    // Predicated region
    $region6: #{tpu_custom_call.1} parent=1 // pred_check
      _
    $region7: #{tpu_custom_call.1} parent=1 // pred_check_branch
      %24 = sbr.rel (0) target = $region9
    $region8: #{tpu_custom_call.1} parent=1 // pred_region
      %26 = vsyncadd [#allocation6], 0
      %s27 = sshll.u32 %s1, 4
      %s28 = int_to_ptr.hbm [resolvable:$true] %s27
      %s29 = sshll.u32 [#allocation5], 4
      %s30 = int_to_ptr.vmem [resolvable:$true] %s29
      %35 = dma.hbm_to_vmem [thread:$0]  %s28, 512, %s30, [#allocation6], 128, 128, 8
    $region9: #{tpu_custom_call.1} parent=1 // pred_fallthru
      _
    // Predicated region
    $region10: #{tpu_custom_call.1} parent=1 // pred_check
      _
    $region11: #{tpu_custom_call.1} parent=1 // pred_check_branch
      %37 = sbr.rel (0) target = $region13
    $region12: #{tpu_custom_call.1} parent=1 // pred_region
      %39 = dma.done [#allocation3], 256
    $region13: #{tpu_custom_call.1} parent=1 // pred_fallthru
      _
    // Predicated region
    $region14: #{tpu_custom_call.1} parent=1 // pred_check
      _
    $region15: #{tpu_custom_call.1} parent=1 // pred_check_branch
      %41 = sbr.rel (0) target = $region17
    $region16: #{tpu_custom_call.1} parent=1 // pred_region
      %43 = dma.done [#allocation6], 512
    $region17: #{tpu_custom_call.1} parent=1 // pred_fallthru
      _
    %v44 = vld [vmem:[#allocation2] sm:$0xff]
    %v45 = vld [vmem:[#allocation2 + $0x8] sm:$0xff]
    %v46 = vld [vmem:[#allocation5] sm:$0xff]
    %v47 = vld [vmem:[#allocation5 + $0x8] sm:$0xff]
    %v48 = vld [vmem:[#allocation5 + $0x10] sm:$0xff]
    %v49 = vld [vmem:[#allocation5 + $0x18] sm:$0xff]
    %vm50 = vcmask 261120
    %v52 = vsel %vm50, %v44, 0
    %v55 = vsel %vm50, %v45, 0
    %57 = vmatpush.msra.mxu0 0.0
    %58 = vmatpush.msra.mxu0 0.0
    %59 = vmatpush.msra.mxu0 0.0
    %60 = vmatpush.msra.mxu0 0.0
    %61 = vmatpush.msra.mxu0 0.0
    %62 = vmatpush.msra.mxu0 0.0
    %63 = vmatpush.msra.mxu0 0.0
    %64 = vmatpush.msra.mxu0 0.0
    %65 = vmatpush.msra.mxu0 0.0
    %66 = vmatpush.msra.mxu0 0.0
    %67 = vmatpush.msra.mxu0 0.0
    %68 = vmatpush.msra.mxu0 0.0
    %69 = vmatpush.msra.mxu0 %v49
    %70 = vmatpush.msra.mxu0 %v48
    %71 = vmatpush.msra.mxu0 %v47
    %72 = vmatpush.msra.mxu0 %v46
    %73 = vmatmul.f32.gmra.mxu0 %v52
    %v74 = vpop.f32.mrf.mxu0
    %v75 = vadd.f32 0.0, %v74
    %76 = vmatmul.f32.gmra.mxu0 %v55
    %v77 = vpop.f32.mrf.mxu0
    %v78 = vadd.f32 0.0, %v77
    %79 = vdwg.mxu0
    %80 = vst [vmem:[#allocation7] sm:$0xff] %v75
    %81 = vst [vmem:[#allocation7 + $0x8] sm:$0xff] %v78
    // Predicated region
    $region18: #{tpu_custom_call.1} parent=1 // pred_check
      _
    $region19: #{tpu_custom_call.1} parent=1 // pred_check_branch
      %83 = sbr.rel (0) target = $region21
    $region20: #{tpu_custom_call.1} parent=1 // pred_region
      %85 = vsyncadd [#allocation4], 0
      %s86 = sshll.u32 [#allocation7], 4
      %s87 = int_to_ptr.vmem [resolvable:$true] %s86
      %s88 = sshll.u32 %s2, 4
      %s89 = int_to_ptr.hbm [resolvable:$true] %s88
      %94 = dma.vmem_to_hbm [thread:$0]  %s87, 256, %s89, [#allocation4], 128, 128, 8
    $region21: #{tpu_custom_call.1} parent=1 // pred_fallthru
      _
    // Predicated region
    $region22: #{tpu_custom_call.1} parent=1 // pred_check
      _
    $region23: #{tpu_custom_call.1} parent=1 // pred_check_branch
      %96 = sbr.rel (0) target = $region25
    $region24: #{tpu_custom_call.1} parent=1 // pred_region
      %98 = dma.done [#allocation4], 256
    $region25: #{tpu_custom_call.1} parent=1 // pred_fallthru
      _
    %99 = vsyncpa [#allocation3], 1
    %100 = vsyncpa [#allocation6], 1
    %101 = vsyncpa [#allocation4], 1

</llo_original>
